<compile_context>
chip_gen: v7x
topology: tpu7x:2x2x1
jax: 0.10.0
libtpu: 0.0.40
codegen_flags: <defaults>
</compile_context>

<pallas_src>
import functools

import jax
import jax.numpy as jnp
from jax import lax
from jax.experimental import pallas as pl
from jax.experimental.pallas import tpu as pltpu

_NORM_EPS = 1e-12                    # torch.nn.functional.normalize default eps
_NORM_EPS_SQ = _NORM_EPS * _NORM_EPS
_NEG_BIG = -1.0e30                   # finite "-inf" init for the online column max


def _supcon_kernel(ffull_ref, labrow_ref, labcol_ref, scale_ref,
                   out_ref,
                   inv_col, colmax, col_expsum, col_msum, col_cnt, loss0_acc,
                   *, tm, eps):
    pid = pl.program_id(0)
    nblk = pl.num_programs(0)
    n = ffull_ref.shape[0]

    # ---- one-time init (block 0): per-feature-dim inverse norms + accumulators ----
    @pl.when(pid == 0)
    def _init():
        f_all = ffull_ref[...]                                       # [N, Dp]
        col_ss = jnp.sum(f_all * f_all, axis=0, keepdims=True)       # [1, Dp]
        inv_col[...] = lax.rsqrt(jnp.maximum(col_ss, _NORM_EPS_SQ))  # 1/max(||col||, eps)
        colmax[...] = jnp.full((1, n), _NEG_BIG, jnp.float32)
        col_expsum[...] = jnp.zeros((1, n), jnp.float32)
        col_msum[...] = jnp.zeros((1, n), jnp.float32)
        col_cnt[...] = jnp.zeros((1, n), jnp.float32)
        loss0_acc[...] = jnp.zeros((1, 1), jnp.float32)

    # ---- anchor rows for this block, sliced out of the resident feature tile.
    #      Fold row L2-norm, contrast-side column L2-norm and the temperature
    #      scale into the LHS so the MXU multiplies against the raw features. ----
    if tm == n:                                                      # single block
        i0 = 0
        f_blk = ffull_ref[...]                                       # [TM, Dp]
        lab_blk = labrow_ref[...]                                    # [TM, 1]
    else:
        i0 = pl.multiple_of(pid * tm, tm)
        f_blk = ffull_ref[pl.ds(i0, tm), :]                          # [TM, Dp]
        lab_blk = labrow_ref[pl.ds(i0, tm), :]                       # [TM, 1]

    row_ss = jnp.sum(f_blk * f_blk, axis=1, keepdims=True)           # [TM, 1]
    inv_row = lax.rsqrt(jnp.maximum(row_ss, _NORM_EPS_SQ))
    s = scale_ref[0]                                                 # max(exp(T), 100)
    a_blk = f_blk * (inv_row * s) * inv_col[...]                     # [TM, Dp]

    # anchor_dot_contrast tile: [TM, N], already scaled.
    dot = lax.dot_general(a_blk, ffull_ref[...],
                          dimension_numbers=(((1,), (1,)), ((), ())),
                          preferred_element_type=jnp.float32)

    # ---- masks rebuilt from labels (no N x N mask input) ----
    gi = i0 + lax.broadcasted_iota(jnp.int32, (tm, n), 0)            # global row ids
    gj = lax.broadcasted_iota(jnp.int32, (tm, n), 1)                 # global col ids
    not_diag = gi != gj
    pos = lab_blk == labcol_ref[...]                                 # [TM, N] bool
    pos_od = jnp.where(jnp.logical_and(pos, not_diag), 1.0, 0.0)     # positives, no diag

    # ---- direction 0 (row softmax): full column extent available per block ----
    rowmax = jnp.max(dot, axis=1, keepdims=True)                     # [TM, 1]
    e_r = jnp.where(not_diag, jnp.exp(dot - rowmax), 0.0)
    r_expsum = jnp.sum(e_r, axis=1, keepdims=True)
    r_msum = jnp.sum(pos_od * dot, axis=1, keepdims=True)
    r_cnt = jnp.sum(pos_od, axis=1, keepdims=True)
    # mean_log_prob_pos_i = msum_i / P_i - rowmax_i - log(expsum_i + eps)
    # TODO(synk): anchors with zero positives divide by 0 (NaN), same as the
    # original PyTorch module; precondition is every anchor has >=1 positive.
    mlpp_r = r_msum / r_cnt - rowmax - jnp.log(r_expsum + eps)
    loss0_acc[...] += jnp.sum(mlpp_r, axis=0, keepdims=True)         # (1, 1)

    # ---- direction 1 (column softmax of the same dot): online accumulation ----
    blk_colmax = jnp.max(dot, axis=0, keepdims=True)                 # [1, N]
    new_colmax = jnp.maximum(colmax[...], blk_colmax)
    rescale = jnp.exp(colmax[...] - new_colmax)
    e_c = jnp.where(not_diag, jnp.exp(dot - new_colmax), 0.0)
    col_expsum[...] = col_expsum[...] * rescale + jnp.sum(e_c, axis=0, keepdims=True)
    colmax[...] = new_colmax
    col_msum[...] += jnp.sum(pos_od * dot, axis=0, keepdims=True)
    col_cnt[...] += jnp.sum(pos_od, axis=0, keepdims=True)

    # ---- finalize on the last row block ----
    @pl.when(pid == nblk - 1)
    def _fin():
        mlpp_c = (col_msum[...] / col_cnt[...]
                  - colmax[...] - jnp.log(col_expsum[...] + eps))    # [1, N]
        loss1 = -jnp.sum(mlpp_c, axis=1, keepdims=True) / n          # (1, 1)
        loss0 = -loss0_acc[...] / n                                  # (1, 1)
        out_ref[...] = (loss0 + loss1) * 0.5


def _pick_row_tile(n):
    for tm in (256, 128, 64, 32, 16, 8):
        if n % tm == 0:
            return tm
    return n   # tiny / odd N: single block (block == full array dims is allowed)


def supcon_loss(features, labels, temperature, eps=1e-8, row_block=None):
    """Pallas implementation of SupConLoss.forward.

    features: [bsz, n_views, ...]  (extra dims flattened, as in the module)
    labels:   [bsz] integer labels
    temperature: (1,) learnable parameter
    row_block: optional row-tile override (must divide N).
    """
    bsz = features.shape[0]
    if features.ndim < 3:
        raise ValueError("`features` needs to be [bsz, n_views, ...]")
    views = features.shape[1]
    feat = features.reshape(bsz, views, -1).astype(jnp.float32)

    # torch.cat(torch.unbind(features, dim=1), dim=0): view-major row stacking.
    full = jnp.transpose(feat, (1, 0, 2)).reshape(views * bsz, -1)
    n, d = full.shape

    labels = labels.reshape(-1).astype(jnp.int32)
    if labels.shape[0] != bsz:
        raise ValueError("Num of labels does not match num of features")

    # Pad the feature dim to a lane multiple of 128. Zero columns are exact
    # no-ops for both normalizations and for the dot products.
    d_pad = ((d + 127) // 128) * 128
    if d_pad != d:
        full = jnp.pad(full, ((0, 0), (0, d_pad - d)))

    # Row r of `full` corresponds to sample r % bsz: two tiny label vectors
    # replace an [N, N] pre-tiled mask input.
    lab_full = jnp.tile(labels, (views,))
    lab_row = lab_full.reshape(n, 1)
    lab_col = lab_full.reshape(1, n)

    # torch.exp(temperature).clamp(100) == max(exp(t), 100)
    scale = jnp.maximum(jnp.exp(temperature.astype(jnp.float32)), 100.0).reshape(1)

    if row_block is not None and n % row_block == 0:
        tm = row_block
    else:
        tm = _pick_row_tile(n)
    grid = (n // tm,)

    out = pl.pallas_call(
        functools.partial(_supcon_kernel, tm=tm, eps=eps),
        out_shape=jax.ShapeDtypeStruct((1, 1), jnp.float32),
        grid=grid,
        in_specs=[
            pl.BlockSpec((n, d_pad), lambda i: (0, 0)),         # full features (resident)
            pl.BlockSpec((n, 1), lambda i: (0, 0)),             # row labels (resident)
            pl.BlockSpec((1, n), lambda i: (0, 0)),             # col labels (resident)
            pl.BlockSpec(memory_space=pltpu.MemorySpace.SMEM),  # scale (1,)
        ],
        out_specs=pl.BlockSpec((1, 1), lambda i: (0, 0)),
        scratch_shapes=[
            pltpu.VMEM((1, d_pad), jnp.float32),   # inverse column norms
            pltpu.VMEM((1, n), jnp.float32),       # online column max
            pltpu.VMEM((1, n), jnp.float32),       # column exp-sum (diag excluded)
            pltpu.VMEM((1, n), jnp.float32),       # column masked dot sum
            pltpu.VMEM((1, n), jnp.float32),       # column positive count
            pltpu.VMEM((1, 1), jnp.float32),       # row-direction loss partial sum
        ],
        compiler_params=pltpu.CompilerParams(
            dimension_semantics=("arbitrary",)),   # column stats carry across row blocks
    )(full, lab_row, lab_col, scale)
    return out[0, 0]


def _supcon_loss_ref(features, labels, temperature, eps=1e-8):
    """Pure-JAX reference mirroring the PyTorch module, for a sanity check."""
    bsz, views = features.shape[0], features.shape[1]
    feat = features.reshape(bsz, views, -1).astype(jnp.float32)
    full = jnp.transpose(feat, (1, 0, 2)).reshape(views * bsz, -1)
    mask = (labels.reshape(-1, 1) == labels.reshape(1, -1)).astype(jnp.float32)
    scale = jnp.maximum(jnp.exp(temperature.astype(jnp.float32)), 100.0)

    a = full / jnp.maximum(jnp.linalg.norm(full, axis=1, keepdims=True), _NORM_EPS)
    ft = full.T
    b = ft / jnp.maximum(jnp.linalg.norm(ft, axis=1, keepdims=True), _NORM_EPS)
    dot = (a @ b) * scale

    n = views * bsz
    logits_mask = 1.0 - jnp.eye(n, dtype=jnp.float32)
    mask_full = jnp.tile(mask, (views, views)) * logits_mask

    def loss_from_dot(dm):
        logits = dm - jnp.max(dm, axis=1, keepdims=True)
        exp_logits = jnp.exp(logits) * logits_mask
        log_prob = logits - jnp.log(jnp.sum(exp_logits, axis=1, keepdims=True) + eps)
        mlpp = jnp.sum(mask_full * log_prob, axis=1) / jnp.sum(mask_full, axis=1)
        return -jnp.mean(mlpp)

    return (loss_from_dot(dot) + loss_from_dot(dot.T)) / 2.0


if __name__ == "__main__":
    key = jax.random.PRNGKey(0)
    k_feat, k_lab = jax.random.split(key)

    bsz, n_views = 8, 2
    # features: [bsz, n_views, 4, 8]  (>3 dims, flattened to D=32 like the module)
    features = jax.random.normal(k_feat, (bsz, n_views, 4, 8), dtype=jnp.float32)
    labels = jax.random.randint(k_lab, (bsz,), 0, 3, dtype=jnp.int32)

    # Module parameter init: temperature = tensor([t_0]) with t_0 = 0.07
    temperature = jnp.array([0.07], dtype=jnp.float32)

    ref = _supcon_loss_ref(features, labels, temperature)

    # Default tiling (single row block at this size).
    loss = supcon_loss(features, labels, temperature)
    loss = jax.block_until_ready(loss)
    assert jnp.isfinite(loss), "loss is not finite"
    assert jnp.allclose(loss, ref, rtol=1e-3, atol=1e-4), (loss, ref)

    # Forced multi-block tiling to exercise the online column-softmax carry.
    loss_mb = supcon_loss(features, labels, temperature, row_block=8)
    loss_mb = jax.block_until_ready(loss_mb)
    assert jnp.isfinite(loss_mb), "multi-block loss is not finite"
    assert jnp.allclose(loss_mb, ref, rtol=1e-3, atol=1e-4), (loss_mb, ref)

    print("KERNEL_OK")
</pallas_src>

<mosaic_0001>
module attributes {stable_mosaic.version = 11 : i64} {
  func.func @_supcon_kernel(%arg0: i32, %arg1: memref<16x128xf32, #tpu.memory_space<vmem>>, %arg2: memref<16x1xi32, #tpu.memory_space<vmem>>, %arg3: memref<1x16xi32, #tpu.memory_space<vmem>>, %arg4: memref<1xf32, #tpu.memory_space<smem>>, %arg5: memref<1x1xf32, #tpu.memory_space<vmem>>, %arg6: memref<1x128xf32, #tpu.memory_space<vmem>>, %arg7: memref<1x16xf32, #tpu.memory_space<vmem>>, %arg8: memref<1x16xf32, #tpu.memory_space<vmem>>, %arg9: memref<1x16xf32, #tpu.memory_space<vmem>>, %arg10: memref<1x16xf32, #tpu.memory_space<vmem>>, %arg11: memref<1x1xf32, #tpu.memory_space<vmem>>) attributes {dimension_semantics = [#tpu.dimension_semantics<arbitrary>], iteration_bounds = array<i64: 1>, scalar_prefetch = 0 : i64, scratch_operands = 6 : i64, tpu.core_type = #tpu.core_type<tc>, window_params = [{pipeline_mode = #tpu.pipeline_mode<synchronous>, transform_indices = @transform_0, window_bounds = array<i64: 16, 128>}, {pipeline_mode = #tpu.pipeline_mode<synchronous>, transform_indices = @transform_1, window_bounds = array<i64: 16, 1>}, {pipeline_mode = #tpu.pipeline_mode<synchronous>, transform_indices = @transform_2, window_bounds = array<i64: 1, 16>}, {transform_indices = @transform_3, window_bounds = array<i64: 1>}, {pipeline_mode = #tpu.pipeline_mode<synchronous>, transform_indices = @transform_4, window_bounds = array<i64: 1, 1>}]} {
    %c0_i32 = arith.constant 0 : i32
    %0 = arith.cmpi eq, %arg0, %c0_i32 : i32
    %1 = arith.extui %0 : i1 to i32
    %c0_i32_0 = arith.constant 0 : i32
    %2 = arith.cmpi ne, %1, %c0_i32_0 : i32
    scf.if %2 {
      %c0_52 = arith.constant 0 : index
      %c0_53 = arith.constant 0 : index
      %92 = vector.load %arg1[%c0_52, %c0_53] : memref<16x128xf32, #tpu.memory_space<vmem>>, vector<16x128xf32>
      %93 = arith.mulf %92, %92 : vector<16x128xf32>
      %cst_54 = arith.constant dense<0.000000e+00> : vector<128xf32>
      %94 = vector.multi_reduction <add>, %93, %cst_54 [0] : vector<16x128xf32> to vector<128xf32>
      %95 = vector.shape_cast %94 : vector<128xf32> to vector<1x128xf32>
      %cst_55 = arith.constant 1.000000e-24 : f32
      %96 = vector.broadcast %cst_55 : f32 to vector<1x128xf32>
      %97 = arith.maximumf %95, %96 : vector<1x128xf32>
      %98 = math.rsqrt %97 : vector<1x128xf32>
      %c0_56 = arith.constant 0 : index
      %c0_57 = arith.constant 0 : index
      %99 = vector.load %arg6[%c0_56, %c0_57] : memref<1x128xf32, #tpu.memory_space<vmem>>, vector<1x128xf32>
      tpu.vector_store %arg6[%c0_56, %c0_57], %98 {strides = array<i32>} : memref<1x128xf32, #tpu.memory_space<vmem>>, vector<1x128xf32>,
      %cst_58 = arith.constant -1.000000e+30 : f32
      %100 = vector.broadcast %cst_58 : f32 to vector<1x16xf32>
      %c0_59 = arith.constant 0 : index
      %c0_60 = arith.constant 0 : index
      %101 = vector.load %arg7[%c0_59, %c0_60] : memref<1x16xf32, #tpu.memory_space<vmem>>, vector<1x16xf32>
      tpu.vector_store %arg7[%c0_59, %c0_60], %100 {strides = array<i32>} : memref<1x16xf32, #tpu.memory_space<vmem>>, vector<1x16xf32>,
      %cst_61 = arith.constant 0.000000e+00 : f32
      %102 = vector.broadcast %cst_61 : f32 to vector<1x16xf32>
      %c0_62 = arith.constant 0 : index
      %c0_63 = arith.constant 0 : index
      %103 = vector.load %arg8[%c0_62, %c0_63] : memref<1x16xf32, #tpu.memory_space<vmem>>, vector<1x16xf32>
      tpu.vector_store %arg8[%c0_62, %c0_63], %102 {strides = array<i32>} : memref<1x16xf32, #tpu.memory_space<vmem>>, vector<1x16xf32>,
      %cst_64 = arith.constant 0.000000e+00 : f32
      %104 = vector.broadcast %cst_64 : f32 to vector<1x16xf32>
      %c0_65 = arith.constant 0 : index
      %c0_66 = arith.constant 0 : index
      %105 = vector.load %arg9[%c0_65, %c0_66] : memref<1x16xf32, #tpu.memory_space<vmem>>, vector<1x16xf32>
      tpu.vector_store %arg9[%c0_65, %c0_66], %104 {strides = array<i32>} : memref<1x16xf32, #tpu.memory_space<vmem>>, vector<1x16xf32>,
      %cst_67 = arith.constant 0.000000e+00 : f32
      %106 = vector.broadcast %cst_67 : f32 to vector<1x16xf32>
      %c0_68 = arith.constant 0 : index
      %c0_69 = arith.constant 0 : index
      %107 = vector.load %arg10[%c0_68, %c0_69] : memref<1x16xf32, #tpu.memory_space<vmem>>, vector<1x16xf32>
      tpu.vector_store %arg10[%c0_68, %c0_69], %106 {strides = array<i32>} : memref<1x16xf32, #tpu.memory_space<vmem>>, vector<1x16xf32>,
      %cst_70 = arith.constant 0.000000e+00 : f32
      %108 = vector.broadcast %cst_70 : f32 to vector<1x1xf32>
      %c0_71 = arith.constant 0 : index
      %c0_72 = arith.constant 0 : index
      %109 = vector.load %arg11[%c0_71, %c0_72] : memref<1x1xf32, #tpu.memory_space<vmem>>, vector<1x1xf32>
      tpu.vector_store %arg11[%c0_71, %c0_72], %108 {strides = array<i32>} : memref<1x1xf32, #tpu.memory_space<vmem>>, vector<1x1xf32>,
    } else {
    }
    %c0 = arith.constant 0 : index
    %c0_1 = arith.constant 0 : index
    %3 = vector.load %arg1[%c0, %c0_1] : memref<16x128xf32, #tpu.memory_space<vmem>>, vector<16x128xf32>
    %c0_2 = arith.constant 0 : index
    %c0_3 = arith.constant 0 : index
    %4 = vector.load %arg2[%c0_2, %c0_3] : memref<16x1xi32, #tpu.memory_space<vmem>>, vector<16x1xi32>
    %5 = arith.mulf %3, %3 : vector<16x128xf32>
    %cst = arith.constant dense<0.000000e+00> : vector<16xf32>
    %6 = vector.multi_reduction <add>, %5, %cst [1] : vector<16x128xf32> to vector<16xf32>
    %7 = vector.shape_cast %6 : vector<16xf32> to vector<16x1xf32>
    %cst_4 = arith.constant 1.000000e-24 : f32
    %8 = vector.broadcast %cst_4 : f32 to vector<16x1xf32>
    %9 = arith.maximumf %7, %8 : vector<16x1xf32>
    %10 = math.rsqrt %9 : vector<16x1xf32>
    %c0_5 = arith.constant 0 : index
    %11 = memref.load %arg4[%c0_5] : memref<1xf32, #tpu.memory_space<smem>>
    %12 = vector.broadcast %11 : f32 to vector<16x1xf32>
    %13 = arith.mulf %10, %12 : vector<16x1xf32>
    %14 = vector.broadcast %13 : vector<16x1xf32> to vector<16x128xf32>
    %15 = arith.mulf %3, %14 : vector<16x128xf32>
    %c0_6 = arith.constant 0 : index
    %c0_7 = arith.constant 0 : index
    %16 = vector.load %arg6[%c0_6, %c0_7] : memref<1x128xf32, #tpu.memory_space<vmem>>, vector<1x128xf32>
    %17 = vector.broadcast %16 : vector<1x128xf32> to vector<16x128xf32>
    %18 = arith.mulf %15, %17 : vector<16x128xf32>
    %c0_8 = arith.constant 0 : index
    %c0_9 = arith.constant 0 : index
    %19 = vector.load %arg1[%c0_8, %c0_9] : memref<16x128xf32, #tpu.memory_space<vmem>>, vector<16x128xf32>
    %cst_10 = arith.constant dense<0.000000e+00> : vector<16x16xf32>
    %20 = tpu.matmul %18, %19, %cst_10 {dimension_numbers = #tpu.dot_dimension_numbers<[1], [1], [0], [0], [0, 0, 1, 0], [], []>} : vector<16x128xf32>, vector<16x128xf32>, vector<16x16xf32> -> vector<16x16xf32>
    %21 = tpu.iota {dimensions = array<i32: 0>} : vector<16x16xi32>
    %c0_i32_11 = arith.constant 0 : i32
    %22 = vector.broadcast %c0_i32_11 : i32 to vector<16x16xi32>
    %23 = arith.addi %22, %21 : vector<16x16xi32>
    %24 = tpu.iota {dimensions = array<i32: 1>} : vector<16x16xi32>
    %25 = arith.cmpi ne, %23, %24 : vector<16x16xi32>
    %c0_12 = arith.constant 0 : index
    %c0_13 = arith.constant 0 : index
    %26 = vector.load %arg3[%c0_12, %c0_13] : memref<1x16xi32, #tpu.memory_space<vmem>>, vector<1x16xi32>
    %27 = vector.broadcast %4 : vector<16x1xi32> to vector<16x16xi32>
    %28 = vector.broadcast %26 : vector<1x16xi32> to vector<16x16xi32>
    %29 = arith.cmpi eq, %27, %28 : vector<16x16xi32>
    %30 = arith.andi %29, %25 : vector<16x16xi1>
    %cst_14 = arith.constant 1.000000e+00 : f32
    %cst_15 = arith.constant 0.000000e+00 : f32
    %31 = vector.broadcast %cst_14 : f32 to vector<16x16xf32>
    %32 = vector.broadcast %cst_15 : f32 to vector<16x16xf32>
    %33 = arith.select %30, %31, %32 : vector<16x16xi1>, vector<16x16xf32>
    %cst_16 = arith.constant dense<0xFF800000> : vector<16xf32>
    %34 = vector.multi_reduction <maximumf>, %20, %cst_16 [1] : vector<16x16xf32> to vector<16xf32>
    %35 = vector.shape_cast %34 : vector<16xf32> to vector<16x1xf32>
    %36 = vector.broadcast %35 : vector<16x1xf32> to vector<16x16xf32>
    %37 = arith.subf %20, %36 : vector<16x16xf32>
    %38 = math.exp %37 : vector<16x16xf32>
    %cst_17 = arith.constant 0.000000e+00 : f32
    %39 = vector.broadcast %cst_17 : f32 to vector<16x16xf32>
    %40 = arith.select %25, %38, %39 : vector<16x16xi1>, vector<16x16xf32>
    %cst_18 = arith.constant dense<0.000000e+00> : vector<16xf32>
    %41 = vector.multi_reduction <add>, %40, %cst_18 [1] : vector<16x16xf32> to vector<16xf32>
    %42 = vector.shape_cast %41 : vector<16xf32> to vector<16x1xf32>
    %43 = arith.mulf %33, %20 : vector<16x16xf32>
    %cst_19 = arith.constant dense<0.000000e+00> : vector<16xf32>
    %44 = vector.multi_reduction <add>, %43, %cst_19 [1] : vector<16x16xf32> to vector<16xf32>
    %45 = vector.shape_cast %44 : vector<16xf32> to vector<16x1xf32>
    %cst_20 = arith.constant dense<0.000000e+00> : vector<16xf32>
    %46 = vector.multi_reduction <add>, %33, %cst_20 [1] : vector<16x16xf32> to vector<16xf32>
    %47 = vector.shape_cast %46 : vector<16xf32> to vector<16x1xf32>
    %48 = arith.divf %45, %47 : vector<16x1xf32>
    %49 = arith.subf %48, %35 : vector<16x1xf32>
    %cst_21 = arith.constant 9.99999993E-9 : f32
    %50 = vector.broadcast %cst_21 : f32 to vector<16x1xf32>
    %51 = arith.addf %42, %50 : vector<16x1xf32>
    %52 = math.log %51 : vector<16x1xf32>
    %53 = arith.subf %49, %52 : vector<16x1xf32>
    %c0_22 = arith.constant 0 : index
    %c0_23 = arith.constant 0 : index
    %54 = vector.load %arg11[%c0_22, %c0_23] : memref<1x1xf32, #tpu.memory_space<vmem>>, vector<1x1xf32>
    %cst_24 = arith.constant dense<0.000000e+00> : vector<1xf32>
    %55 = vector.multi_reduction <add>, %53, %cst_24 [0] : vector<16x1xf32> to vector<1xf32>
    %56 = vector.shape_cast %55 : vector<1xf32> to vector<1x1xf32>
    %57 = arith.addf %54, %56 : vector<1x1xf32>
    %c0_25 = arith.constant 0 : index
    %c0_26 = arith.constant 0 : index
    %58 = vector.load %arg11[%c0_25, %c0_26] : memref<1x1xf32, #tpu.memory_space<vmem>>, vector<1x1xf32>
    tpu.vector_store %arg11[%c0_25, %c0_26], %57 {strides = array<i32>} : memref<1x1xf32, #tpu.memory_space<vmem>>, vector<1x1xf32>,
    %cst_27 = arith.constant dense<0xFF800000> : vector<16xf32>
    %59 = vector.multi_reduction <maximumf>, %20, %cst_27 [0] : vector<16x16xf32> to vector<16xf32>
    %60 = vector.shape_cast %59 : vector<16xf32> to vector<1x16xf32>
    %c0_28 = arith.constant 0 : index
    %c0_29 = arith.constant 0 : index
    %61 = vector.load %arg7[%c0_28, %c0_29] : memref<1x16xf32, #tpu.memory_space<vmem>>, vector<1x16xf32>
    %62 = arith.maximumf %61, %60 : vector<1x16xf32>
    %c0_30 = arith.constant 0 : index
    %c0_31 = arith.constant 0 : index
    %63 = vector.load %arg7[%c0_30, %c0_31] : memref<1x16xf32, #tpu.memory_space<vmem>>, vector<1x16xf32>
    %64 = arith.subf %63, %62 : vector<1x16xf32>
    %65 = math.exp %64 : vector<1x16xf32>
    %66 = vector.broadcast %62 : vector<1x16xf32> to vector<16x16xf32>
    %67 = arith.subf %20, %66 : vector<16x16xf32>
    %68 = math.exp %67 : vector<16x16xf32>
    %cst_32 = arith.constant 0.000000e+00 : f32
    %69 = vector.broadcast %cst_32 : f32 to vector<16x16xf32>
    %70 = arith.select %25, %68, %69 : vector<16x16xi1>, vector<16x16xf32>
    %c0_33 = arith.constant 0 : index
    %c0_34 = arith.constant 0 : index
    %71 = vector.load %arg8[%c0_33, %c0_34] : memref<1x16xf32, #tpu.memory_space<vmem>>, vector<1x16xf32>
    %72 = arith.mulf %71, %65 : vector<1x16xf32>
    %cst_35 = arith.constant dense<0.000000e+00> : vector<16xf32>
    %73 = vector.multi_reduction <add>, %70, %cst_35 [0] : vector<16x16xf32> to vector<16xf32>
    %74 = vector.shape_cast %73 : vector<16xf32> to vector<1x16xf32>
    %75 = arith.addf %72, %74 : vector<1x16xf32>
    %c0_36 = arith.constant 0 : index
    %c0_37 = arith.constant 0 : index
    %76 = vector.load %arg8[%c0_36, %c0_37] : memref<1x16xf32, #tpu.memory_space<vmem>>, vector<1x16xf32>
    tpu.vector_store %arg8[%c0_36, %c0_37], %75 {strides = array<i32>} : memref<1x16xf32, #tpu.memory_space<vmem>>, vector<1x16xf32>,
    %c0_38 = arith.constant 0 : index
    %c0_39 = arith.constant 0 : index
    %77 = vector.load %arg7[%c0_38, %c0_39] : memref<1x16xf32, #tpu.memory_space<vmem>>, vector<1x16xf32>
    tpu.vector_store %arg7[%c0_38, %c0_39], %62 {strides = array<i32>} : memref<1x16xf32, #tpu.memory_space<vmem>>, vector<1x16xf32>,
    %c0_40 = arith.constant 0 : index
    %c0_41 = arith.constant 0 : index
    %78 = vector.load %arg9[%c0_40, %c0_41] : memref<1x16xf32, #tpu.memory_space<vmem>>, vector<1x16xf32>
    %79 = arith.mulf %33, %20 : vector<16x16xf32>
    %cst_42 = arith.constant dense<0.000000e+00> : vector<16xf32>
    %80 = vector.multi_reduction <add>, %79, %cst_42 [0] : vector<16x16xf32> to vector<16xf32>
    %81 = vector.shape_cast %80 : vector<16xf32> to vector<1x16xf32>
    %82 = arith.addf %78, %81 : vector<1x16xf32>
    %c0_43 = arith.constant 0 : index
    %c0_44 = arith.constant 0 : index
    %83 = vector.load %arg9[%c0_43, %c0_44] : memref<1x16xf32, #tpu.memory_space<vmem>>, vector<1x16xf32>
    tpu.vector_store %arg9[%c0_43, %c0_44], %82 {strides = array<i32>} : memref<1x16xf32, #tpu.memory_space<vmem>>, vector<1x16xf32>,
    %c0_45 = arith.constant 0 : index
    %c0_46 = arith.constant 0 : index
    %84 = vector.load %arg10[%c0_45, %c0_46] : memref<1x16xf32, #tpu.memory_space<vmem>>, vector<1x16xf32>
    %cst_47 = arith.constant dense<0.000000e+00> : vector<16xf32>
    %85 = vector.multi_reduction <add>, %33, %cst_47 [0] : vector<16x16xf32> to vector<16xf32>
    %86 = vector.shape_cast %85 : vector<16xf32> to vector<1x16xf32>
    %87 = arith.addf %84, %86 : vector<1x16xf32>
    %c0_48 = arith.constant 0 : index
    %c0_49 = arith.constant 0 : index
    %88 = vector.load %arg10[%c0_48, %c0_49] : memref<1x16xf32, #tpu.memory_space<vmem>>, vector<1x16xf32>
    tpu.vector_store %arg10[%c0_48, %c0_49], %87 {strides = array<i32>} : memref<1x16xf32, #tpu.memory_space<vmem>>, vector<1x16xf32>,
    %c0_i32_50 = arith.constant 0 : i32
    %89 = arith.cmpi eq, %arg0, %c0_i32_50 : i32
    %90 = arith.extui %89 : i1 to i32
    %c0_i32_51 = arith.constant 0 : i32
    %91 = arith.cmpi ne, %90, %c0_i32_51 : i32
    scf.if %91 {
      %c0_52 = arith.constant 0 : index
      %c0_53 = arith.constant 0 : index
      %92 = vector.load %arg9[%c0_52, %c0_53] : memref<1x16xf32, #tpu.memory_space<vmem>>, vector<1x16xf32>
      %c0_54 = arith.constant 0 : index
      %c0_55 = arith.constant 0 : index
      %93 = vector.load %arg10[%c0_54, %c0_55] : memref<1x16xf32, #tpu.memory_space<vmem>>, vector<1x16xf32>
      %94 = arith.divf %92, %93 : vector<1x16xf32>
      %c0_56 = arith.constant 0 : index
      %c0_57 = arith.constant 0 : index
      %95 = vector.load %arg7[%c0_56, %c0_57] : memref<1x16xf32, #tpu.memory_space<vmem>>, vector<1x16xf32>
      %96 = arith.subf %94, %95 : vector<1x16xf32>
      %c0_58 = arith.constant 0 : index
      %c0_59 = arith.constant 0 : index
      %97 = vector.load %arg8[%c0_58, %c0_59] : memref<1x16xf32, #tpu.memory_space<vmem>>, vector<1x16xf32>
      %cst_60 = arith.constant 9.99999993E-9 : f32
      %98 = vector.broadcast %cst_60 : f32 to vector<1x16xf32>
      %99 = arith.addf %97, %98 : vector<1x16xf32>
      %100 = math.log %99 : vector<1x16xf32>
      %101 = arith.subf %96, %100 : vector<1x16xf32>
      %cst_61 = arith.constant dense<0.000000e+00> : vector<1xf32>
      %102 = vector.multi_reduction <add>, %101, %cst_61 [1] : vector<1x16xf32> to vector<1xf32>
      %103 = vector.shape_cast %102 : vector<1xf32> to vector<1x1xf32>
      %cst_62 = arith.constant 0.000000e+00 : f32
      %104 = vector.broadcast %cst_62 : f32 to vector<1x1xf32>
      %105 = arith.subf %104, %103 : vector<1x1xf32>
      %cst_63 = arith.constant 1.600000e+01 : f32
      %106 = vector.broadcast %cst_63 : f32 to vector<1x1xf32>
      %107 = arith.divf %105, %106 : vector<1x1xf32>
      %c0_64 = arith.constant 0 : index
      %c0_65 = arith.constant 0 : index
      %108 = vector.load %arg11[%c0_64, %c0_65] : memref<1x1xf32, #tpu.memory_space<vmem>>, vector<1x1xf32>
      %cst_66 = arith.constant 0.000000e+00 : f32
      %109 = vector.broadcast %cst_66 : f32 to vector<1x1xf32>
      %110 = arith.subf %109, %108 : vector<1x1xf32>
      %cst_67 = arith.constant 1.600000e+01 : f32
      %111 = vector.broadcast %cst_67 : f32 to vector<1x1xf32>
      %112 = arith.divf %110, %111 : vector<1x1xf32>
      %113 = arith.addf %112, %107 : vector<1x1xf32>
      %cst_68 = arith.constant 5.000000e-01 : f32
      %114 = vector.broadcast %cst_68 : f32 to vector<1x1xf32>
      %115 = arith.mulf %113, %114 : vector<1x1xf32>
      %c0_69 = arith.constant 0 : index
      %c0_70 = arith.constant 0 : index
      %116 = vector.load %arg5[%c0_69, %c0_70] : memref<1x1xf32, #tpu.memory_space<vmem>>, vector<1x1xf32>
      tpu.vector_store %arg5[%c0_69, %c0_70], %115 {strides = array<i32>} : memref<1x1xf32, #tpu.memory_space<vmem>>, vector<1x1xf32>,
    } else {
    }
    return
  }
  func.func @transform_0(%arg0: i32) -> (i32, i32) {
    %c0_i32 = arith.constant 0 : i32
    %c0_i32_0 = arith.constant 0 : i32
    %c0_i32_1 = arith.constant 0 : i32
    return %c0_i32, %c0_i32_0 : i32, i32
  }
  func.func @transform_1(%arg0: i32) -> (i32, i32) {
    %c0_i32 = arith.constant 0 : i32
    %c0_i32_0 = arith.constant 0 : i32
    %c0_i32_1 = arith.constant 0 : i32
    return %c0_i32, %c0_i32_0 : i32, i32
  }
  func.func @transform_2(%arg0: i32) -> (i32, i32) {
    %c0_i32 = arith.constant 0 : i32
    %c0_i32_0 = arith.constant 0 : i32
    %c0_i32_1 = arith.constant 0 : i32
    return %c0_i32, %c0_i32_0 : i32, i32
  }
  func.func @transform_3(%arg0: i32) -> i32 {
    %c0_i32 = arith.constant 0 : i32
    %c0_i32_0 = arith.constant 0 : i32
    return %c0_i32 : i32
  }
  func.func @transform_4(%arg0: i32) -> (i32, i32) {
    %c0_i32 = arith.constant 0 : i32
    %c0_i32_0 = arith.constant 0 : i32
    %c0_i32_1 = arith.constant 0 : i32
    return %c0_i32, %c0_i32_0 : i32, i32
  }
}

</mosaic_0001>

<llo_original>
// kernel: tpu_custom_call.1
$region0: #{tpu_custom_call.1}
  #allocation0 [shape = 'u32[]', space=smem, size = 0x4, offset = 0x4, fixed_abs, tag = 'smem constant byte address 0x4 - core index']
  #allocation1 [shape = 'u32[144,128]{1,0:T(1,128)}', space=vmem, size = 0x12000, scoped, tag = 'internal scratch']
  #allocation2 [shape = 'f32[1,128]{1,0:T(1,128)}', space=vmem, size = 0x200, scoped, tag = 'scratch operand']
  #allocation3 [shape = 'f32[1,16]{1,0:T(1,128)}', space=vmem, size = 0x200, scoped, tag = 'scratch operand']
  #allocation4 [shape = 'f32[1,16]{1,0:T(1,128)}', space=vmem, size = 0x200, scoped, tag = 'scratch operand']
  #allocation5 [shape = 'f32[1,16]{1,0:T(1,128)}', space=vmem, size = 0x200, scoped, tag = 'scratch operand']
  #allocation6 [shape = 'f32[1,16]{1,0:T(1,128)}', space=vmem, size = 0x200, scoped, tag = 'scratch operand']
  #allocation7 [shape = 'f32[1,1]{1,0:T(1,128)}', space=vmem, size = 0x200, scoped, tag = 'scratch operand']
  #allocation8 [shape = 'f32[1]{0:T(128)S(6)}', space=smem, size = 0x200, scoped, tag = 'scoped memory for tpu_custom_call.1']
  %s0 = inlined_call_operand.vmem [shape: f32[16,128], index: 0, kind: input, shape index: {}]
  %s1 = inlined_call_operand.vmem [shape: s32[16,1], index: 1, kind: input, shape index: {}]
  %s2 = inlined_call_operand.vmem [shape: s32[1,16], index: 2, kind: input, shape index: {}]
  %s3 = inlined_call_operand.<no memory space> [shape: f32[1], index: 3, kind: input, shape index: {}]
  %s4 = inlined_call_operand.hbm [shape: f32[1,1], index: 4, kind: output, shape index: {}]
  %s5 = sld [smem:[#allocation0]]
  $region34: #{tpu_custom_call.1} parent=0
    _
  %s7 = ssub.s32 1, %s5
  %s8 = scalar_select 0, %s7, %s5
  %9 = sst [smem:[#allocation8]] %s3
  $region1: #{tpu_custom_call.1} parent=0
    #allocation9 [shape = 'u8[512]{0}', space=vmem, size = 0x400, scoped, tag = 'output window, operand 0, single buffered']
    #allocation10 [shape = 's32[1]{0}', space=sflag, size = 0x4, scoped, tag = 'scoped memory for tpu_custom_call.1']
    %10 = vsyncpa [#allocation10], 0
    // Predicated region
    $region2: #{tpu_custom_call.1} parent=1 // pred_check
      _
    $region3: #{tpu_custom_call.1} parent=1 // pred_check_branch
      %12 = sbr.rel (0) target = $region5
    $region4: #{tpu_custom_call.1} parent=1 // pred_region
      _
    $region5: #{tpu_custom_call.1} parent=1 // pred_fallthru
      _
    // Predicated region
    $region6: #{tpu_custom_call.1} parent=1 // pred_check
      _
    $region7: #{tpu_custom_call.1} parent=1 // pred_check_branch
      %14 = sbr.rel (0) target = $region9
    $region8: #{tpu_custom_call.1} parent=1 // pred_region
      _
    $region9: #{tpu_custom_call.1} parent=1 // pred_fallthru
      _
    // Predicated region
    $region10: #{tpu_custom_call.1} parent=1 // pred_check
      _
    $region11: #{tpu_custom_call.1} parent=1 // pred_check_branch
      %16 = sbr.rel (0) target = $region13
    $region12: #{tpu_custom_call.1} parent=1 // pred_region
      _
    $region13: #{tpu_custom_call.1} parent=1 // pred_fallthru
      _
    // Predicated region
    $region14: #{tpu_custom_call.1} parent=1 // pred_check
      _
    $region15: #{tpu_custom_call.1} parent=1 // pred_check_branch
      %18 = sbr.rel (0) target = $region17
    $region16: #{tpu_custom_call.1} parent=1 // pred_region
      _
    $region17: #{tpu_custom_call.1} parent=1 // pred_fallthru
      _
    %p19 = scmp.eq.s32.totalorder 0, 0
    // Predicated region
    $region18: #{tpu_custom_call.1} parent=1 // pred_check
      %p20 = pneg %p19
    $region19: #{tpu_custom_call.1} parent=1 // pred_check_branch
      %22 = sbr.rel (%p20) target = $region21
    $region20: #{tpu_custom_call.1} parent=1 // pred_region
      %v23 = vld [vmem:[%s0] sm:$0xff]
      %v24 = vld [vmem:[%s0 + $0x8] sm:$0xff]
      %v25 = vmul.f32 %v23, %v23
      %v26 = vmul.f32 %v24, %v24
      %v27 = vadd.f32 %v25, %v26
      %v28 = vrot.slane %v27, 4
      %v29 = vadd.f32 %v27, %v28
      %v30 = vrot.slane %v29, 2
      %v31 = vadd.f32 %v29, %v30
      %v32 = vrot.slane %v31, 1
      %v33 = vadd.f32 %v31, %v32
      %v34 = vmax.f32 %v33, 1e-24
      %v35 = vrsqrt.pop %v34
      %36 = vst [vmem:[#allocation2] sm:$0x1] %v35
      %vm37 = vcmask 122880
      %38 = vst.msk [vmem:[#allocation3] sm:$0x1] %vm37, -1e+30
      %39 = vst.msk [vmem:[#allocation4] sm:$0x1] %vm37, 0.0
      %40 = vst.msk [vmem:[#allocation5] sm:$0x1] %vm37, 0.0
      %41 = vst.msk [vmem:[#allocation6] sm:$0x1] %vm37, 0.0
      %vm42 = vcmask 0
      %43 = vst.msk [vmem:[#allocation7] sm:$0x1] %vm42, 0.0
    $region21: #{tpu_custom_call.1} parent=1 // pred_fallthru
      _
    %v44 = vld [vmem:[%s0] sm:$0xff]
    %v45 = vld [vmem:[%s0 + $0x8] sm:$0xff]
    %v46 = vld [vmem:[%s1] sm:$0xff]
    %v47 = vld [vmem:[%s1 + $0x8] sm:$0xff]
    %v48 = vmul.f32 %v44, %v44
    %v49 = vmul.f32 %v45, %v45
    %50 = vadd.xlane.f32.xlu0 %v48
    %v51 = vpop.xlane.xlu0 %50
    %52 = vadd.xlane.f32.xlu0 %v49
    %v53 = vpop.xlane.xlu0 %52
    %v54 = vmax.f32 %v51, 1e-24
    %v55 = vmax.f32 %v53, 1e-24
    %v56 = vrsqrt.pop %v54
    %v57 = vrsqrt.pop %v55
    %s58 = sld [smem:[#allocation8]]
    %v59 = vstv %s58
    %v60 = vmul.f32 %v56, %v59
    %v61 = vmul.f32 %v57, %v59
    %v62 = vmul.f32 %v44, %v60
    %v63 = vmul.f32 %v45, %v61
    %v64 = vld [vmem:[#allocation2] sm:$0x1]
    %v66 = vlaneseq
    %v67 = vshrl.u32 %v66, 7
    %v68 = vsub.s32 0, %v67
    %v69 = vrot.slane %v64, %v68
    %v71 = vmul.f32 %v62, %v69
    %v72 = vmul.f32 %v63, %v69
    %73 = vmatprep.subr.mxu0 0.0
    %74 = vmatpush1.xpose.msra.mxu0 %v44
    %75 = vmatprep.subr.mxu0 0.0
    %76 = vmatpush1.xpose.msra.mxu0 %v45
    %77 = vmatprep.subr.mxu0 0.0
    %78 = vmatpush1.xpose.msra.mxu0 0.0
    %79 = vmatprep.subr.mxu0 0.0
    %80 = vmatpush1.xpose.msra.mxu0 0.0
    %81 = vmatprep.subr.mxu0 0.0
    %82 = vmatpush1.xpose.msra.mxu0 0.0
    %83 = vmatprep.subr.mxu0 0.0
    %84 = vmatpush1.xpose.msra.mxu0 0.0
    %85 = vmatprep.subr.mxu0 0.0
    %86 = vmatpush1.xpose.msra.mxu0 0.0
    %87 = vmatprep.subr.mxu0 0.0
    %88 = vmatpush1.xpose.msra.mxu0 0.0
    %89 = vmatprep.subr.mxu0 0.0
    %90 = vmatpush1.xpose.msra.mxu0 0.0
    %91 = vmatprep.subr.mxu0 0.0
    %92 = vmatpush1.xpose.msra.mxu0 0.0
    %93 = vmatprep.subr.mxu0 0.0
    %94 = vmatpush1.xpose.msra.mxu0 0.0
    %95 = vmatprep.subr.mxu0 0.0
    %96 = vmatpush1.xpose.msra.mxu0 0.0
    %97 = vmatprep.subr.mxu0 0.0
    %98 = vmatpush1.xpose.msra.mxu0 0.0
    %99 = vmatprep.subr.mxu0 0.0
    %100 = vmatpush1.xpose.msra.mxu0 0.0
    %101 = vmatprep.subr.mxu0 0.0
    %102 = vmatpush1.xpose.msra.mxu0 0.0
    %103 = vmatprep.subr.mxu0 0.0
    %104 = vmatpush1.xpose.msra.mxu0 0.0
    %105 = vmatprep.subr.mxu0 0.0
    %106 = vmatpush1.xpose.msra.mxu0 0.0
    %107 = vmatprep.subr.mxu0 0.0
    %108 = vmatpush1.xpose.msra.mxu0 0.0
    %109 = vmatprep.subr.mxu0 0.0
    %110 = vmatpush1.xpose.msra.mxu0 0.0
    %111 = vmatprep.subr.mxu0 0.0
    %112 = vmatpush1.xpose.msra.mxu0 0.0
    %113 = vmatprep.subr.mxu0 0.0
    %114 = vmatpush1.xpose.msra.mxu0 0.0
    %115 = vmatprep.subr.mxu0 0.0
    %116 = vmatpush1.xpose.msra.mxu0 0.0
    %117 = vmatprep.subr.mxu0 0.0
    %118 = vmatpush1.xpose.msra.mxu0 0.0
    %119 = vmatprep.subr.mxu0 0.0
    %120 = vmatpush1.xpose.msra.mxu0 0.0
    %121 = vmatprep.subr.mxu0 0.0
    %122 = vmatpush1.xpose.msra.mxu0 0.0
    %123 = vmatprep.subr.mxu0 0.0
    %124 = vmatpush1.xpose.msra.mxu0 0.0
    %125 = vmatprep.subr.mxu0 0.0
    %126 = vmatpush1.xpose.msra.mxu0 0.0
    %127 = vmatprep.subr.mxu0 0.0
    %128 = vmatpush1.xpose.msra.mxu0 0.0
    %129 = vmatprep.subr.mxu0 0.0
    %130 = vmatpush1.xpose.msra.mxu0 0.0
    %131 = vmatprep.subr.mxu0 0.0
    %132 = vmatpush1.xpose.msra.mxu0 0.0
    %133 = vmatprep.subr.mxu0 0.0
    %134 = vmatpush1.xpose.msra.mxu0 0.0
    %135 = vmatprep.subr.mxu0 0.0
    %136 = vmatpush1.xpose.msra.mxu0 0.0
    %137 = vmatprep.mubr.f32.mxu0 0.0
    %138 = vmatmul.mubr.f32.gmra.mrb[0].mxu0 %v71
    %v139 = vpop.f32.mrb[0].mxu0
    %v140 = vadd.f32 0.0, %v139
    %v141 = vpop.f32.mrb[0].mxu0
    %142 = vmatprep.mubr.f32.mxu0 0.0
    %143 = vmatmul.mubr.f32.gmra.mrb[0].mxu0 %v72
    %v144 = vpop.f32.mrb[0].mxu0
    %v145 = vadd.f32 0.0, %v144
    %v146 = vpop.f32.mrb[0].mxu0
    %147 = vdwg.mxu0
    %v148 = vlaneseq
    %v149 = vshrl.u32 %v148, 7
    %v150 = vadd.s32 %v149, 8
    %v151 = vlaneseq
    %v152 = vand.u32 %v151, 127
    %vm153 = vcmp.ne.s32.totalorder %v149, %v152
    %vm154 = vcmp.ne.s32.totalorder %v150, %v152
    %v155 = vld [vmem:[%s2] sm:$0x1]
    %156 = vset.pattern.permute.xlu0 0
    %157 = vperm.xlu0 %156, %v46
    %v158 = vpop.permute.xlu0 %157
    %159 = vset.pattern.permute.xlu0 0
    %160 = vperm.xlu0 %159, %v47
    %v161 = vpop.permute.xlu0 %160
    %v162 = vlaneseq
    %v163 = vshrl.u32 %v162, 7
    %v164 = vsub.s32 0, %v163
    %v165 = vrot.slane %v155, %v164
    %vm166 = vcmp.eq.s32.totalorder %v158, %v165
    %vm167 = vcmp.eq.s32.totalorder %v161, %v165
    %vm168 = vmand %vm166, %vm153
    %vm169 = vmand %vm167, %vm154
    %v170 = vsel %vm168, 1.0, 0.0
    %v171 = vsel %vm169, 1.0, 0.0
    %vm172 = vcmask 130048
    %v173 = vsel %vm172, %v140, -inf
    %174 = vmax.xlane.f32.xlu0 %v173
    %v175 = vpop.xlane.xlu0 %174
    %v176 = vsel %vm172, %v145, -inf
    %177 = vmax.xlane.f32.xlu0 %v176
    %v178 = vpop.xlane.xlu0 %177
    %v179 = vsub.f32 %v140, %v175
    %v180 = vsub.f32 %v145, %v178
    %v181 = vmul.f32 %v179, 1.442695
    %v182 = vpow.pop %v181
    %v183 = vmul.f32 %v180, 1.442695
    %v184 = vpow.pop %v183
    %v185 = vsel %vm153, %v182, 0.0
    %v186 = vsel %vm154, %v184, 0.0
    %v187 = vsel %vm172, %v185, 0.0
    %188 = vadd.xlane.f32.xlu0 %v187
    %v189 = vpop.xlane.xlu0 %188
    %v190 = vsel %vm172, %v186, 0.0
    %191 = vadd.xlane.f32.xlu0 %v190
    %v192 = vpop.xlane.xlu0 %191
    %v193 = vmul.f32 %v170, %v140
    %v194 = vmul.f32 %v171, %v145
    %v195 = vsel %vm172, %v193, 0.0
    %196 = vadd.xlane.f32.xlu0 %v195
    %v197 = vpop.xlane.xlu0 %196
    %v198 = vsel %vm172, %v194, 0.0
    %199 = vadd.xlane.f32.xlu0 %v198
    %v200 = vpop.xlane.xlu0 %199
    %v201 = vsel %vm172, %v170, 0.0
    %202 = vadd.xlane.f32.xlu0 %v201
    %v203 = vpop.xlane.xlu0 %202
    %v204 = vsel %vm172, %v171, 0.0
    %205 = vadd.xlane.f32.xlu0 %v204
    %v206 = vpop.xlane.xlu0 %205
    %v207 = vrcp.pop %v203
    %v208 = vmul.f32 %v197, %v207
    %v209 = vrcp.pop %v206
    %v210 = vmul.f32 %v200, %v209
    %v211 = vsub.f32 %v208, %v175
    %v212 = vsub.f32 %v210, %v178
    %v213 = vadd.f32 %v189, 1e-08
    %v214 = vadd.f32 %v192, 1e-08
    %v215 = vlog2.pop %v213
    %v216 = vmul.f32 %v215, 0.6931472
    %v217 = vlog2.pop %v214
    %v218 = vmul.f32 %v217, 0.6931472
    %v219 = vsub.f32 %v211, %v216
    %v220 = vsub.f32 %v212, %v218
    %v221 = vld [vmem:[#allocation7] sm:$0x1]
    %v222 = vadd.f32 %v219, %v220
    %v223 = vrot.slane %v222, 4
    %v224 = vadd.f32 %v222, %v223
    %v225 = vrot.slane %v224, 2
    %v226 = vadd.f32 %v224, %v225
    %v227 = vrot.slane %v226, 1
    %v228 = vadd.f32 %v226, %v227
    %v229 = vadd.f32 %v221, %v228
    %vm230 = vcmask 0
    %231 = vst.msk [vmem:[#allocation7] sm:$0x1] %vm230, %v229
    %v232 = vmax.f32 %v173, %v176
    %v233 = vrot.slane %v232, 4
    %v234 = vmax.f32 %v232, %v233
    %v235 = vrot.slane %v234, 2
    %v236 = vmax.f32 %v234, %v235
    %v237 = vrot.slane %v236, 1
    %v238 = vmax.f32 %v236, %v237
    %v239 = vld [vmem:[#allocation3] sm:$0x1]
    %v240 = vmax.f32 %v239, %v238
    %v241 = vsub.f32 %v239, %v240
    %v242 = vmul.f32 %v241, 1.442695
    %v243 = vpow.pop %v242
    %v245 = vlaneseq
    %v246 = vshrl.u32 %v245, 7
    %v247 = vsub.s32 0, %v246
    %v248 = vrot.slane %v240, %v247
    %v250 = vsub.f32 %v140, %v248
    %v251 = vsub.f32 %v145, %v248
    %v252 = vmul.f32 %v250, 1.442695
    %v253 = vpow.pop %v252
    %v254 = vmul.f32 %v251, 1.442695
    %v255 = vpow.pop %v254
    %v256 = vsel %vm153, %v253, 0.0
    %v257 = vsel %vm154, %v255, 0.0
    %v258 = vld [vmem:[#allocation4] sm:$0x1]
    %v259 = vmul.f32 %v258, %v243
    %v260 = vsel %vm172, %v256, 0.0
    %v261 = vsel %vm172, %v257, 0.0
    %v262 = vadd.f32 %v260, %v261
    %v263 = vrot.slane %v262, 4
    %v264 = vadd.f32 %v262, %v263
    %v265 = vrot.slane %v264, 2
    %v266 = vadd.f32 %v264, %v265
    %v267 = vrot.slane %v266, 1
    %v268 = vadd.f32 %v266, %v267
    %v269 = vadd.f32 %v259, %v268
    %vm270 = vcmask 122880
    %271 = vst.msk [vmem:[#allocation4] sm:$0x1] %vm270, %v269
    %272 = vst.msk [vmem:[#allocation3] sm:$0x1] %vm270, %v240
    %v273 = vld [vmem:[#allocation5] sm:$0x1]
    %v274 = vadd.f32 %v195, %v198
    %v275 = vrot.slane %v274, 4
    %v276 = vadd.f32 %v274, %v275
    %v277 = vrot.slane %v276, 2
    %v278 = vadd.f32 %v276, %v277
    %v279 = vrot.slane %v278, 1
    %v280 = vadd.f32 %v278, %v279
    %v281 = vadd.f32 %v273, %v280
    %282 = vst.msk [vmem:[#allocation5] sm:$0x1] %vm270, %v281
    %v283 = vld [vmem:[#allocation6] sm:$0x1]
    %v284 = vadd.f32 %v201, %v204
    %v285 = vrot.slane %v284, 4
    %v286 = vadd.f32 %v284, %v285
    %v287 = vrot.slane %v286, 2
    %v288 = vadd.f32 %v286, %v287
    %v289 = vrot.slane %v288, 1
    %v290 = vadd.f32 %v288, %v289
    %v291 = vadd.f32 %v283, %v290
    %292 = vst.msk [vmem:[#allocation6] sm:$0x1] %vm270, %v291
    // Predicated region
    $region22: #{tpu_custom_call.1} parent=1 // pred_check
      %p293 = pneg %p19
    $region23: #{tpu_custom_call.1} parent=1 // pred_check_branch
      %295 = sbr.rel (%p293) target = $region25
    $region24: #{tpu_custom_call.1} parent=1 // pred_region
      %v296 = vld [vmem:[#allocation5] sm:$0x1]
      %v297 = vld [vmem:[#allocation6] sm:$0x1]
      %v298 = vrcp.pop %v297
      %v299 = vmul.f32 %v296, %v298
      %v300 = vld [vmem:[#allocation3] sm:$0x1]
      %v301 = vsub.f32 %v299, %v300
      %v302 = vld [vmem:[#allocation4] sm:$0x1]
      %v303 = vadd.f32 %v302, 1e-08
      %v304 = vlog2.pop %v303
      %v305 = vmul.f32 %v304, 0.6931472
      %v306 = vsub.f32 %v301, %v305
      %v307 = vsel %vm270, %v306, 0.0
      %308 = vadd.xlane.f32.xlu0 %v307
      %v309 = vpop.xlane.xlu0 %308
      %v310 = vsub.f32 0.0, %v309
      %v311 = vrcp.pop 16.0
      %v312 = vmul.f32 %v310, %v311
      %v313 = vld [vmem:[#allocation7] sm:$0x1]
      %v314 = vsub.f32 0.0, %v313
      %v315 = vmul.f32 %v314, %v311
      %v316 = vadd.f32 %v315, %v312
      %v317 = vmul.f32 %v316, 0.5
      %318 = vst.msk [vmem:[#allocation9] sm:$0x1] %vm230, %v317
    $region25: #{tpu_custom_call.1} parent=1 // pred_fallthru
      _
    // Predicated region
    $region26: #{tpu_custom_call.1} parent=1 // pred_check
      _
    $region27: #{tpu_custom_call.1} parent=1 // pred_check_branch
      %320 = sbr.rel (0) target = $region29
    $region28: #{tpu_custom_call.1} parent=1 // pred_region
      %s322 = ssub.s32 16, 16
      %323 = vsyncadd [#allocation10], %s322
      %s325 = sshll.u32 [#allocation9], 4
      %s326 = int_to_ptr.vmem [resolvable:$true] %s325
      %328 = dma.vmem_to_hbm [thread:$0]  %s326, 16, %s4, [#allocation10]
    $region29: #{tpu_custom_call.1} parent=1 // pred_fallthru
      _
    // Predicated region
    $region30: #{tpu_custom_call.1} parent=1 // pred_check
      _
    $region31: #{tpu_custom_call.1} parent=1 // pred_check_branch
      %330 = sbr.rel (0) target = $region33
    $region32: #{tpu_custom_call.1} parent=1 // pred_region
      %331 = dma.done [#allocation10], 16
    $region33: #{tpu_custom_call.1} parent=1 // pred_fallthru
      _
    %332 = vsyncpa [#allocation10], 1

</llo_original>
